<compile_context>
chip_gen: v6e
topology: v6e:2x2x1
jax: 0.10.0
libtpu: 0.0.40
codegen_flags: <defaults>
</compile_context>

<pallas_src>
import math

import jax
import jax.numpy as jnp
from jax.experimental import pallas as pl
from jax.experimental.pallas import tpu as pltpu

IN_SHAPE = (5, 11)                      # input_shape
FEAT = (20, 11)                         # feature_size
D_IN = IN_SHAPE[0] * IN_SHAPE[1]        # 55
D_OUT = FEAT[0] * FEAT[1]               # 220
STATS_W = 128                           # lane-padded width of folded stats head (col 0 = mean, col 1 = std)
NEG_SLOPE = 1.0                         # nn.LeakyReLU(True) -> negative_slope = 1.0 (identity)


def _round_up(n, m):
    return ((n + m - 1) // m) * m


def _vr_kernel(x_ref, eps_ref, weff_ref, beff_ref, reff_ref, rbeff_ref,
               prod_ref, stats_ref):
    f32 = jnp.float32
    x = x_ref[...]                                            # (TM, 55)
    eps = eps_ref[...]                                        # (TM, 1)

    # Folded stats head: 55 -> 2 as a single small matmul (N padded to 128 lanes).
    z = jnp.dot(x, weff_ref[...], preferred_element_type=f32) + beff_ref[...]   # (TM, 128)
    mean = z[:, 0:1]                                          # (TM, 1)
    std = z[:, 1:2]                                           # (TM, 1)
    sampled = mean + std * eps                                # reparameterization

    # Folded recommender head: 1 -> 220 rank-1 broadcast multiply-add on the VPU.
    prod_ref[...] = sampled * reff_ref[...] + rbeff_ref[...]  # (TM, 220)

    # Tiny stats output: [mean, exp(std)].
    stats_ref[...] = jnp.concatenate([mean, jnp.exp(std)], axis=1)   # (TM, 2)


def fold_params(params):
    """Collapse the affine stats/recommender stacks into effective weights (exact math)."""
    (w1, b1, w2, b2, w3, b3, r1, rb1, r2, rb2, r3, rb3) = [
        jnp.asarray(p, jnp.float32) for p in params]
    w_eff = w1 @ w2 @ w3                                      # (55, 2)
    b_eff = b1 @ w2 @ w3 + b2 @ w3 + b3                       # (1, 2)
    r_eff = r1 @ r2 @ r3                                      # (1, 220)
    rb_eff = rb1 @ r2 @ r3 + rb2 @ r3 + rb3                   # (1, 220)
    w_eff = jnp.pad(w_eff, ((0, 0), (0, STATS_W - w_eff.shape[1])))   # (55, 128)
    b_eff = jnp.pad(b_eff, ((0, 0), (0, STATS_W - b_eff.shape[1])))   # (1, 128)
    return w_eff, b_eff, r_eff, rb_eff


def variational_recommender_forward(x, eps, params, *, tile_m=4096):
    """x: (B, 5, 11) or (5, 11) float32; eps: (B, 1) float32; params: flat tuple of 12 arrays."""
    if x.ndim == 2:
        x = x[None]
    B = x.shape[0]
    x_flat = x.reshape(B, D_IN).astype(jnp.float32)
    eps = jnp.asarray(eps, jnp.float32).reshape(B, 1)

    # Tile selection: tiles divide B nearly evenly (avoids padding a near-full extra tile),
    # and grid >= 2 when there is enough work to keep both v7x TensorCores busy.
    min_tiles = 2 if B >= 1024 else 1
    n_tiles = max(pl.cdiv(B, tile_m), min_tiles)
    tm = _round_up(pl.cdiv(B, n_tiles), 8)
    n_tiles = pl.cdiv(B, tm)
    b_pad = n_tiles * tm
    if b_pad != B:
        x_flat = jnp.pad(x_flat, ((0, b_pad - B), (0, 0)))    # zero rows -> finite outputs
        eps = jnp.pad(eps, ((0, b_pad - B), (0, 0)))

    consts = fold_params(params)                              # w_eff, b_eff, r_eff, rb_eff
    const_specs = [pl.BlockSpec(c.shape, lambda i: (0, 0)) for c in consts]
    const_bytes = int(sum(int(c.size) for c in consts)) * 4

    prod, stats = pl.pallas_call(
        _vr_kernel,
        out_shape=(jax.ShapeDtypeStruct((b_pad, D_OUT), jnp.float32),
                   jax.ShapeDtypeStruct((b_pad, 2), jnp.float32)),
        grid=(n_tiles,),
        in_specs=[pl.BlockSpec((tm, D_IN), lambda i: (i, 0)),
                  pl.BlockSpec((tm, 1), lambda i: (i, 0))] + const_specs,
        out_specs=(pl.BlockSpec((tm, D_OUT), lambda i: (i, 0)),
                   pl.BlockSpec((tm, 2), lambda i: (i, 0))),
        compiler_params=pltpu.CompilerParams(
            dimension_semantics=("parallel",),
            vmem_limit_bytes=32 * 1024 * 1024,
        ),
        cost_estimate=pl.CostEstimate(
            flops=b_pad * (2 * D_IN * STATS_W + 4 * D_OUT + 8),
            transcendentals=b_pad,
            bytes_accessed=b_pad * (D_IN + 1 + D_OUT + 2) * 4 + const_bytes,
        ),
    )(x_flat, eps, *consts)

    mean = stats[:B, 0:1]
    exp_std = stats[:B, 1:2]
    produced = prod[:B].reshape(B, FEAT[0], FEAT[1])
    return (mean, exp_std), produced


# ----------------------------- init + reference -----------------------------

def _init_linear(key, fan_in, fan_out):
    # PyTorch nn.Linear default init: U(-1/sqrt(fan_in), 1/sqrt(fan_in)).
    kw, kb = jax.random.split(key)
    bound = 1.0 / math.sqrt(fan_in)
    w = jax.random.uniform(kw, (fan_in, fan_out), jnp.float32, -bound, bound)
    b = jax.random.uniform(kb, (1, fan_out), jnp.float32, -bound, bound)
    return w, b


def init_params(key):
    ks = jax.random.split(key, 6)
    w1, b1 = _init_linear(ks[0], D_IN, 64)
    w2, b2 = _init_linear(ks[1], 64, 64)
    w3, b3 = _init_linear(ks[2], 64, 2)
    r1, rb1 = _init_linear(ks[3], 1, 128)
    r2, rb2 = _init_linear(ks[4], 128, 64)
    r3, rb3 = _init_linear(ks[5], 64, D_OUT)
    return (w1, b1, w2, b2, w3, b3, r1, rb1, r2, rb2, r3, rb3)


def _leaky_relu(x, slope=NEG_SLOPE):
    return jnp.where(x >= 0, x, slope * x)   # slope 1.0 -> identity (literal LeakyReLU(True))


def _reference_forward(x, eps, params):
    (w1, b1, w2, b2, w3, b3, r1, rb1, r2, rb2, r3, rb3) = params
    if x.ndim == 2:
        x = x[None]
    B = x.shape[0]
    h = x.reshape(B, -1)
    h = _leaky_relu(h @ w1 + b1)
    h = _leaky_relu(h @ w2 + b2)
    z = h @ w3 + b3
    mean, std = z[:, 0:1], z[:, 1:2]
    sampled = mean + std * eps
    g = _leaky_relu(sampled @ r1 + rb1)
    g = _leaky_relu(g @ r2 + rb2)
    p = g @ r3 + rb3
    return (mean, jnp.exp(std)), p.reshape(B, FEAT[0], FEAT[1])


if __name__ == "__main__":
    key = jax.random.PRNGKey(0)
    kx, keps, kp = jax.random.split(key, 3)
    params = init_params(kp)

    # Small batch (single grid step).
    B = 2
    x = jax.random.normal(kx, (B, IN_SHAPE[0], IN_SHAPE[1]), jnp.float32)
    eps = jax.random.normal(keps, (B, 1), jnp.float32)   # N(0,1) sample for reparam

    (mean, exp_std), produced = jax.block_until_ready(
        variational_recommender_forward(x, eps, params))

    (mean_r, exp_std_r), produced_r = _reference_forward(x, eps, params)
    assert mean.shape == (B, 1) and exp_std.shape == (B, 1)
    assert produced.shape == (B, FEAT[0], FEAT[1])
    assert jnp.allclose(mean, mean_r, atol=1e-4, rtol=1e-4), "mean mismatch"
    assert jnp.allclose(exp_std, exp_std_r, atol=1e-4, rtol=1e-4), "exp(std) mismatch"
    assert jnp.allclose(produced, produced_r, atol=1e-4, rtol=1e-4), "produced mismatch"

    # Multi-tile path: B not a multiple of the tile -> grid > 1 + padded last tile.
    B2 = 20
    x2 = jax.random.normal(kx, (B2, IN_SHAPE[0], IN_SHAPE[1]), jnp.float32)
    eps2 = jax.random.normal(keps, (B2, 1), jnp.float32)
    (m2, s2), p2 = jax.block_until_ready(
        variational_recommender_forward(x2, eps2, params, tile_m=8))
    (m2r, s2r), p2r = _reference_forward(x2, eps2, params)
    assert jnp.allclose(m2, m2r, atol=1e-4, rtol=1e-4), "mean mismatch (tiled)"
    assert jnp.allclose(s2, s2r, atol=1e-4, rtol=1e-4), "exp(std) mismatch (tiled)"
    assert jnp.allclose(p2, p2r, atol=1e-4, rtol=1e-4), "produced mismatch (tiled)"

    print("KERNEL_OK")
</pallas_src>

<mosaic_0001>
module attributes {stable_mosaic.version = 11 : i64} {
  func.func @_vr_kernel(%arg0: i32, %arg1: memref<8x55xf32, #tpu.memory_space<vmem>>, %arg2: memref<8x1xf32, #tpu.memory_space<vmem>>, %arg3: memref<55x128xf32, #tpu.memory_space<vmem>>, %arg4: memref<1x128xf32, #tpu.memory_space<vmem>>, %arg5: memref<1x220xf32, #tpu.memory_space<vmem>>, %arg6: memref<1x220xf32, #tpu.memory_space<vmem>>, %arg7: memref<8x220xf32, #tpu.memory_space<vmem>>, %arg8: memref<8x2xf32, #tpu.memory_space<vmem>>) attributes {dimension_semantics = [#tpu.dimension_semantics<parallel>], iteration_bounds = array<i64: 1>, scalar_prefetch = 0 : i64, scratch_operands = 0 : i64, tpu.core_type = #tpu.core_type<tc>, window_params = [{transform_indices = @transform_0, window_bounds = array<i64: 8, 55>}, {transform_indices = @transform_1, window_bounds = array<i64: 8, 1>}, {pipeline_mode = #tpu.pipeline_mode<synchronous>, transform_indices = @transform_2, window_bounds = array<i64: 55, 128>}, {pipeline_mode = #tpu.pipeline_mode<synchronous>, transform_indices = @transform_3, window_bounds = array<i64: 1, 128>}, {pipeline_mode = #tpu.pipeline_mode<synchronous>, transform_indices = @transform_4, window_bounds = array<i64: 1, 220>}, {pipeline_mode = #tpu.pipeline_mode<synchronous>, transform_indices = @transform_5, window_bounds = array<i64: 1, 220>}, {transform_indices = @transform_6, window_bounds = array<i64: 8, 220>}, {transform_indices = @transform_7, window_bounds = array<i64: 8, 2>}]} {
    %c0 = arith.constant 0 : index
    %c0_0 = arith.constant 0 : index
    %0 = vector.load %arg1[%c0, %c0_0] : memref<8x55xf32, #tpu.memory_space<vmem>>, vector<8x55xf32>
    %c0_1 = arith.constant 0 : index
    %c0_2 = arith.constant 0 : index
    %1 = vector.load %arg2[%c0_1, %c0_2] : memref<8x1xf32, #tpu.memory_space<vmem>>, vector<8x1xf32>
    %c0_3 = arith.constant 0 : index
    %c0_4 = arith.constant 0 : index
    %2 = vector.load %arg3[%c0_3, %c0_4] : memref<55x128xf32, #tpu.memory_space<vmem>>, vector<55x128xf32>
    %cst = arith.constant dense<0.000000e+00> : vector<8x128xf32>
    %3 = tpu.matmul %0, %2, %cst {dimension_numbers = #tpu.dot_dimension_numbers<[1], [0], [0], [1], [0, 0, 1, 1], [], []>} : vector<8x55xf32>, vector<55x128xf32>, vector<8x128xf32> -> vector<8x128xf32>
    %c0_5 = arith.constant 0 : index
    %c0_6 = arith.constant 0 : index
    %4 = vector.load %arg4[%c0_5, %c0_6] : memref<1x128xf32, #tpu.memory_space<vmem>>, vector<1x128xf32>
    %5 = vector.broadcast %4 : vector<1x128xf32> to vector<8x128xf32>
    %6 = arith.addf %3, %5 : vector<8x128xf32>
    %7 = vector.extract_strided_slice %6 {offsets = [0, 0], sizes = [8, 1], strides = [1, 1]} : vector<8x128xf32> to vector<8x1xf32>
    %8 = vector.extract_strided_slice %6 {offsets = [0, 1], sizes = [8, 1], strides = [1, 1]} : vector<8x128xf32> to vector<8x1xf32>
    %9 = arith.mulf %8, %1 : vector<8x1xf32>
    %10 = arith.addf %7, %9 : vector<8x1xf32>
    %c0_7 = arith.constant 0 : index
    %c0_8 = arith.constant 0 : index
    %11 = vector.load %arg5[%c0_7, %c0_8] : memref<1x220xf32, #tpu.memory_space<vmem>>, vector<1x220xf32>
    %12 = vector.broadcast %10 : vector<8x1xf32> to vector<8x220xf32>
    %13 = vector.broadcast %11 : vector<1x220xf32> to vector<8x220xf32>
    %14 = arith.mulf %12, %13 : vector<8x220xf32>
    %c0_9 = arith.constant 0 : index
    %c0_10 = arith.constant 0 : index
    %15 = vector.load %arg6[%c0_9, %c0_10] : memref<1x220xf32, #tpu.memory_space<vmem>>, vector<1x220xf32>
    %16 = vector.broadcast %15 : vector<1x220xf32> to vector<8x220xf32>
    %17 = arith.addf %14, %16 : vector<8x220xf32>
    %c0_11 = arith.constant 0 : index
    %c0_12 = arith.constant 0 : index
    %18 = vector.load %arg7[%c0_11, %c0_12] : memref<8x220xf32, #tpu.memory_space<vmem>>, vector<8x220xf32>
    tpu.vector_store %arg7[%c0_11, %c0_12], %17 {strides = array<i32>} : memref<8x220xf32, #tpu.memory_space<vmem>>, vector<8x220xf32>,
    %19 = math.exp %8 : vector<8x1xf32>
    %20 = tpu.concatenate %7, %19 in 1 : vector<8x1xf32>, vector<8x1xf32> -> vector<8x2xf32>
    %c0_13 = arith.constant 0 : index
    %c0_14 = arith.constant 0 : index
    %21 = vector.load %arg8[%c0_13, %c0_14] : memref<8x2xf32, #tpu.memory_space<vmem>>, vector<8x2xf32>
    tpu.vector_store %arg8[%c0_13, %c0_14], %20 {strides = array<i32>} : memref<8x2xf32, #tpu.memory_space<vmem>>, vector<8x2xf32>,
    return
  }
  func.func @transform_0(%arg0: i32) -> (i32, i32) {
    %c0_i32 = arith.constant 0 : i32
    %c0_i32_0 = arith.constant 0 : i32
    return %arg0, %c0_i32 : i32, i32
  }
  func.func @transform_1(%arg0: i32) -> (i32, i32) {
    %c0_i32 = arith.constant 0 : i32
    %c0_i32_0 = arith.constant 0 : i32
    return %arg0, %c0_i32 : i32, i32
  }
  func.func @transform_2(%arg0: i32) -> (i32, i32) {
    %c0_i32 = arith.constant 0 : i32
    %c0_i32_0 = arith.constant 0 : i32
    %c0_i32_1 = arith.constant 0 : i32
    return %c0_i32, %c0_i32_0 : i32, i32
  }
  func.func @transform_3(%arg0: i32) -> (i32, i32) {
    %c0_i32 = arith.constant 0 : i32
    %c0_i32_0 = arith.constant 0 : i32
    %c0_i32_1 = arith.constant 0 : i32
    return %c0_i32, %c0_i32_0 : i32, i32
  }
  func.func @transform_4(%arg0: i32) -> (i32, i32) {
    %c0_i32 = arith.constant 0 : i32
    %c0_i32_0 = arith.constant 0 : i32
    %c0_i32_1 = arith.constant 0 : i32
    return %c0_i32, %c0_i32_0 : i32, i32
  }
  func.func @transform_5(%arg0: i32) -> (i32, i32) {
    %c0_i32 = arith.constant 0 : i32
    %c0_i32_0 = arith.constant 0 : i32
    %c0_i32_1 = arith.constant 0 : i32
    return %c0_i32, %c0_i32_0 : i32, i32
  }
  func.func @transform_6(%arg0: i32) -> (i32, i32) {
    %c0_i32 = arith.constant 0 : i32
    %c0_i32_0 = arith.constant 0 : i32
    return %arg0, %c0_i32 : i32, i32
  }
  func.func @transform_7(%arg0: i32) -> (i32, i32) {
    %c0_i32 = arith.constant 0 : i32
    %c0_i32_0 = arith.constant 0 : i32
    return %arg0, %c0_i32 : i32, i32
  }
}

</mosaic_0001>

<llo_original>
// kernel: tpu_custom_call.1
$region0: #{tpu_custom_call.1}
  #allocation0 [shape = 'u32[]', space=smem, size = 0x4, offset = 0x4, fixed_abs, tag = 'smem constant byte address 0x4 - core index']
  #allocation1 [shape = 'u32[144,128]{1,0:T(1,128)}', space=vmem, size = 0x12000, scoped, tag = 'internal scratch']
  %s0 = inlined_call_operand.vmem [shape: f32[8,55], index: 0, kind: input, shape index: {}]
  %s1 = inlined_call_operand.vmem [shape: f32[8,1], index: 1, kind: input, shape index: {}]
  %s2 = inlined_call_operand.hbm [shape: f32[55,128], index: 2, kind: input, shape index: {}]
  %s3 = inlined_call_operand.vmem [shape: f32[1,128], index: 3, kind: input, shape index: {}]
  %s4 = inlined_call_operand.vmem [shape: f32[1,220], index: 4, kind: input, shape index: {}]
  %s5 = inlined_call_operand.vmem [shape: f32[1,220], index: 5, kind: input, shape index: {}]
  %s6 = inlined_call_operand.hbm [shape: f32[8,220], index: 6, kind: output, shape index: {0}]
  %s7 = inlined_call_operand.vmem [shape: f32[8,2], index: 7, kind: output, shape index: {1}]
  %8 = xla_tuple %s6, %s7
  %s9 = sld [smem:[#allocation0]]
  $region46: #{tpu_custom_call.1} parent=0
    _
  %s11 = ssub.s32 1, %s9
  %s12 = scalar_select 0, %s11, %s9
  $region1: #{tpu_custom_call.1} parent=0
    #allocation2 [shape = 'u8[28672]{0}', space=vmem, size = 0x7000, scoped, tag = 'input window, operand 2, single buffered']
    #allocation3 [shape = 's32[1]{0}', space=sflag, size = 0x4, scoped, tag = 'scoped memory for tpu_custom_call.1']
    #allocation4 [shape = 's32[1]{0}', space=sflag, size = 0x4, scoped, tag = 'scoped memory for tpu_custom_call.1']
    #allocation5 [shape = 'u8[8192]{0}', space=vmem, size = 0x2000, scoped, tag = 'output window, operand 0, single buffered']
    %13 = vsyncpa [#allocation3], 0
    %14 = vsyncpa [#allocation4], 0
    // Predicated region
    $region2: #{tpu_custom_call.1} parent=1 // pred_check
      _
    $region3: #{tpu_custom_call.1} parent=1 // pred_check_branch
      %16 = sbr.rel (0) target = $region5
    $region4: #{tpu_custom_call.1} parent=1 // pred_region
      _
    $region5: #{tpu_custom_call.1} parent=1 // pred_fallthru
      _
    // Predicated region
    $region6: #{tpu_custom_call.1} parent=1 // pred_check
      _
    $region7: #{tpu_custom_call.1} parent=1 // pred_check_branch
      %18 = sbr.rel (0) target = $region9
    $region8: #{tpu_custom_call.1} parent=1 // pred_region
      _
    $region9: #{tpu_custom_call.1} parent=1 // pred_fallthru
      _
    // Predicated region
    $region10: #{tpu_custom_call.1} parent=1 // pred_check
      _
    $region11: #{tpu_custom_call.1} parent=1 // pred_check_branch
      %20 = sbr.rel (0) target = $region13
    $region12: #{tpu_custom_call.1} parent=1 // pred_region
      %s22 = ssub.s32 896, 896
      %23 = vsyncadd [#allocation3], %s22
      %s24 = sshll.u32 [#allocation2], 4
      %s25 = int_to_ptr.vmem [resolvable:$true] %s24
      %30 = dma.hbm_to_vmem [thread:$0]  %s2, 896, %s25, [#allocation3], 128, 128, 8
    $region13: #{tpu_custom_call.1} parent=1 // pred_fallthru
      _
    // Predicated region
    $region14: #{tpu_custom_call.1} parent=1 // pred_check
      _
    $region15: #{tpu_custom_call.1} parent=1 // pred_check_branch
      %32 = sbr.rel (0) target = $region17
    $region16: #{tpu_custom_call.1} parent=1 // pred_region
      _
    $region17: #{tpu_custom_call.1} parent=1 // pred_fallthru
      _
    // Predicated region
    $region18: #{tpu_custom_call.1} parent=1 // pred_check
      _
    $region19: #{tpu_custom_call.1} parent=1 // pred_check_branch
      %34 = sbr.rel (0) target = $region21
    $region20: #{tpu_custom_call.1} parent=1 // pred_region
      _
    $region21: #{tpu_custom_call.1} parent=1 // pred_fallthru
      _
    // Predicated region
    $region22: #{tpu_custom_call.1} parent=1 // pred_check
      _
    $region23: #{tpu_custom_call.1} parent=1 // pred_check_branch
      %36 = sbr.rel (0) target = $region25
    $region24: #{tpu_custom_call.1} parent=1 // pred_region
      _
    $region25: #{tpu_custom_call.1} parent=1 // pred_fallthru
      _
    // Predicated region
    $region26: #{tpu_custom_call.1} parent=1 // pred_check
      _
    $region27: #{tpu_custom_call.1} parent=1 // pred_check_branch
      %38 = sbr.rel (0) target = $region29
    $region28: #{tpu_custom_call.1} parent=1 // pred_region
      %39 = dma.done [#allocation3], 896
    $region29: #{tpu_custom_call.1} parent=1 // pred_fallthru
      _
    %v40 = vld [vmem:[%s0] sm:$0xff]
    %v41 = vld [vmem:[%s1] sm:$0xff]
    %v42 = vld [vmem:[#allocation2] sm:$0xff]
    %v43 = vld [vmem:[#allocation2 + $0x8] sm:$0xff]
    %v44 = vld [vmem:[#allocation2 + $0x10] sm:$0xff]
    %v45 = vld [vmem:[#allocation2 + $0x18] sm:$0xff]
    %v46 = vld [vmem:[#allocation2 + $0x20] sm:$0xff]
    %v47 = vld [vmem:[#allocation2 + $0x28] sm:$0xff]
    %v48 = vld [vmem:[#allocation2 + $0x30] sm:$0x7f]
    %v49 = vld [vmem:[%s3] sm:$0x1]
    %v51 = vlaneseq
    %v52 = vshrl.u32 %v51, 7
    %v53 = vsub.s32 0, %v52
    %v54 = vrot.slane %v49, %v53
    %vm56 = vcmask 449536
    %v58 = vsel %vm56, %v40, 0
    %vm60 = vcmask 1046528
    %v62 = vsel %vm60, %v48, 0
    %64 = vmatprep.subr.mxu0 0.0
    %65 = vmatpush1.msra.mxu0 0.0
    %66 = vmatprep.subr.mxu0 0.0
    %67 = vmatpush1.msra.mxu0 0.0
    %68 = vmatprep.subr.mxu0 0.0
    %69 = vmatpush1.msra.mxu0 0.0
    %70 = vmatprep.subr.mxu0 0.0
    %71 = vmatpush1.msra.mxu0 0.0
    %72 = vmatprep.subr.mxu0 0.0
    %73 = vmatpush1.msra.mxu0 0.0
    %74 = vmatprep.subr.mxu0 0.0
    %75 = vmatpush1.msra.mxu0 0.0
    %76 = vmatprep.subr.mxu0 0.0
    %77 = vmatpush1.msra.mxu0 0.0
    %78 = vmatprep.subr.mxu0 0.0
    %79 = vmatpush1.msra.mxu0 0.0
    %80 = vmatprep.subr.mxu0 0.0
    %81 = vmatpush1.msra.mxu0 0.0
    %82 = vmatprep.subr.mxu0 0.0
    %83 = vmatpush1.msra.mxu0 %v62
    %84 = vmatprep.subr.mxu0 0.0
    %85 = vmatpush1.msra.mxu0 %v47
    %86 = vmatprep.subr.mxu0 0.0
    %87 = vmatpush1.msra.mxu0 %v46
    %88 = vmatprep.subr.mxu0 0.0
    %89 = vmatpush1.msra.mxu0 %v45
    %90 = vmatprep.subr.mxu0 0.0
    %91 = vmatpush1.msra.mxu0 %v44
    %92 = vmatprep.subr.mxu0 0.0
    %93 = vmatpush1.msra.mxu0 %v43
    %94 = vmatprep.subr.mxu0 0.0
    %95 = vmatpush1.msra.mxu0 %v42
    %96 = vmatprep.subr.mxu0 0.0
    %97 = vmatpush2.msra.mxu0 0.0
    %98 = vmatprep.subr.mxu0 0.0
    %99 = vmatpush2.msra.mxu0 0.0
    %100 = vmatprep.subr.mxu0 0.0
    %101 = vmatpush2.msra.mxu0 0.0
    %102 = vmatprep.subr.mxu0 0.0
    %103 = vmatpush2.msra.mxu0 0.0
    %104 = vmatprep.subr.mxu0 0.0
    %105 = vmatpush2.msra.mxu0 0.0
    %106 = vmatprep.subr.mxu0 0.0
    %107 = vmatpush2.msra.mxu0 0.0
    %108 = vmatprep.subr.mxu0 0.0
    %109 = vmatpush2.msra.mxu0 0.0
    %110 = vmatprep.subr.mxu0 0.0
    %111 = vmatpush2.msra.mxu0 0.0
    %112 = vmatprep.subr.mxu0 0.0
    %113 = vmatpush2.msra.mxu0 0.0
    %114 = vmatprep.subr.mxu0 0.0
    %115 = vmatpush2.msra.mxu0 0.0
    %116 = vmatprep.subr.mxu0 0.0
    %117 = vmatpush2.msra.mxu0 0.0
    %118 = vmatprep.subr.mxu0 0.0
    %119 = vmatpush2.msra.mxu0 0.0
    %120 = vmatprep.subr.mxu0 0.0
    %121 = vmatpush2.msra.mxu0 0.0
    %122 = vmatprep.subr.mxu0 0.0
    %123 = vmatpush2.msra.mxu0 0.0
    %124 = vmatprep.subr.mxu0 0.0
    %125 = vmatpush2.msra.mxu0 0.0
    %126 = vmatprep.subr.mxu0 0.0
    %127 = vmatpush2.msra.mxu0 0.0
    %128 = vmatprep.mubr.f32.mxu0 0.0
    %129 = vmatmul.mubr.f32.gmra.mxu0 %v58
    %v130 = vpop.f32.mrf.mxu0
    %v131 = vadd.f32 %v54, %v130
    %v132 = vpop.f32.mrf.mxu0
    %133 = vdwg.mxu0
    %135 = vrot.lane.b32.xlu0 %v41, 1
    %v136 = vpop.permute.xlu0 %135
    %v138 = vmul.f32 %v131, %v136
    %140 = vrot.lane.b32.xlu0 %v138, 127
    %v141 = vpop.permute.xlu0 %140
    %v143 = vadd.f32 %v131, %v141
    %v144 = vld [vmem:[%s4] sm:$0x3]
    %146 = vset.pattern.permute.xlu0 0
    %147 = vperm.xlu0 %146, %v143
    %v148 = vpop.permute.xlu0 %147
    %v151 = vlaneseq
    %v152 = vshrl.u32 %v151, 7
    %v153 = vsub.s32 0, %v152
    %v154 = vrot.slane %v144, %v153
    %v155 = vlaneseq
    %v156 = vshrl.u32 %v155, 7
    %v157 = vsub.s32 1, %v156
    %v158 = vrot.slane %v144, %v157
    %v161 = vmul.f32 %v148, %v154
    %v162 = vmul.f32 %v148, %v158
    %v163 = vld [vmem:[%s5] sm:$0x3]
    %v165 = vlaneseq
    %v166 = vshrl.u32 %v165, 7
    %v167 = vsub.s32 0, %v166
    %v168 = vrot.slane %v163, %v167
    %v169 = vlaneseq
    %v170 = vshrl.u32 %v169, 7
    %v171 = vsub.s32 1, %v170
    %v172 = vrot.slane %v163, %v171
    %v175 = vadd.f32 %v161, %v168
    %v176 = vadd.f32 %v162, %v172
    %177 = vst [vmem:[#allocation5] sm:$0xff] %v175
    %vm178 = vcmask 752640
    %179 = vst.msk [vmem:[#allocation5 + $0x8] sm:$0xff] %vm178, %v176
    %v180 = vmul.f32 %v131, 1.442695
    %v181 = vpow.pop %v180
    %vm182 = vcmask 7168
    %v183 = vsel %vm182, %v131, %v181
    %vm184 = vcmask 15360
    %185 = vst.msk [vmem:[%s7] sm:$0xff] %vm184, %v183
    // Predicated region
    $region30: #{tpu_custom_call.1} parent=1 // pred_check
      _
    $region31: #{tpu_custom_call.1} parent=1 // pred_check_branch
      %187 = sbr.rel (0) target = $region33
    $region32: #{tpu_custom_call.1} parent=1 // pred_region
      %s189 = ssub.s32 256, 256
      %190 = vsyncadd [#allocation4], %s189
      %s192 = sshll.u32 [#allocation5], 4
      %s193 = int_to_ptr.vmem [resolvable:$true] %s192
      %195 = dma.vmem_to_hbm [thread:$0]  %s193, 256, %s6, [#allocation4]
    $region33: #{tpu_custom_call.1} parent=1 // pred_fallthru
      _
    // Predicated region
    $region34: #{tpu_custom_call.1} parent=1 // pred_check
      _
    $region35: #{tpu_custom_call.1} parent=1 // pred_check_branch
      %197 = sbr.rel (0) target = $region37
    $region36: #{tpu_custom_call.1} parent=1 // pred_region
      _
    $region37: #{tpu_custom_call.1} parent=1 // pred_fallthru
      _
    // Predicated region
    $region38: #{tpu_custom_call.1} parent=1 // pred_check
      _
    $region39: #{tpu_custom_call.1} parent=1 // pred_check_branch
      %199 = sbr.rel (0) target = $region41
    $region40: #{tpu_custom_call.1} parent=1 // pred_region
      %200 = dma.done [#allocation4], 256
    $region41: #{tpu_custom_call.1} parent=1 // pred_fallthru
      _
    // Predicated region
    $region42: #{tpu_custom_call.1} parent=1 // pred_check
      _
    $region43: #{tpu_custom_call.1} parent=1 // pred_check_branch
      %202 = sbr.rel (0) target = $region45
    $region44: #{tpu_custom_call.1} parent=1 // pred_region
      _
    $region45: #{tpu_custom_call.1} parent=1 // pred_fallthru
      _
    %203 = vsyncpa [#allocation3], 1
    %204 = vsyncpa [#allocation4], 1

</llo_original>
